<compile_context>
chip_gen: v6e
topology: v6e:2x2x1
jax: 0.10.0
libtpu: 0.0.40
codegen_flags: <defaults>
</compile_context>

<pallas_src>
import functools

import jax
import jax.numpy as jnp
from jax.experimental import pallas as pl
from jax.experimental.pallas import tpu as pltpu


def _tversky_partial_kernel(pred_ref, label_ref, tp_ref, sl_ref, sp_ref,
                            *, hw, tile, needs_mask):
    """Accumulate per-(batch, channel) partial sums of p*l, l, p.

    pred_ref / label_ref : (C, tile) block of the (B, C, HW) inputs.
    tp_ref / sl_ref / sp_ref : (C, 1) output blocks, resident across the tile axis.
    """
    i = pl.program_id(1)

    @pl.when(i == 0)
    def _():
        tp_ref[...] = jnp.zeros_like(tp_ref)
        sl_ref[...] = jnp.zeros_like(sl_ref)
        sp_ref[...] = jnp.zeros_like(sp_ref)

    p = jax.nn.sigmoid(pred_ref[...].astype(jnp.float32))   # (C, tile)
    l = label_ref[...].astype(jnp.float32)                  # (C, tile)

    if needs_mask:
        # Zero out-of-range lanes of the last (partial) tile.  Mask BOTH p
        # (post-sigmoid) and l so garbage / NaN padding cannot leak into sums.
        num_valid = hw - i * tile
        lane = jax.lax.broadcasted_iota(jnp.int32, p.shape, 1)
        mask = lane < num_valid
        p = jnp.where(mask, p, 0.0)
        l = jnp.where(mask, l, 0.0)

    tp_ref[...] += jnp.sum(p * l, axis=-1, keepdims=True)   # sum(probs * label)
    sl_ref[...] += jnp.sum(l, axis=-1, keepdims=True)       # sum(label)
    sp_ref[...] += jnp.sum(p, axis=-1, keepdims=True)       # sum(probs)


def tversky_loss(pred, label, *, alpha=0.7, eps=1.0,
                 vmem_budget_bytes=8 * 1024 * 1024):
    """Tversky loss for NCHW `pred` (raw logits) and `label` (0/1 masks)."""
    B, C, H, W = pred.shape
    HW = H * W

    # Free, layout-preserving reshape (no HBM copy, unlike a transpose).
    pred_r = pred.reshape(B, C, HW)
    label_r = label.reshape(B, C, HW)

    # Largest lane tile keeping 2 inputs x 2 pipeline buffers under the VMEM
    # budget (conservative: fits default scoped VMEM on v5e/v6e/v7x).  The
    # kernel is pure HBM streaming, so bigger tiles -> fewer grid steps.
    itemsize = max(pred_r.dtype.itemsize, label_r.dtype.itemsize)
    max_tile = vmem_budget_bytes // (2 * 2 * C * itemsize)
    max_tile = max(128, (max_tile // 128) * 128)

    if HW <= max_tile:
        tile = HW                       # full-dim block is always legal
        needs_mask = False
    else:
        tile = max_tile                 # multiple of 128; tail masked in-kernel
        needs_mask = (HW % tile) != 0
    num_tiles = pl.cdiv(HW, tile)

    kernel = functools.partial(_tversky_partial_kernel,
                               hw=HW, tile=tile, needs_mask=needs_mask)

    part_shape = jax.ShapeDtypeStruct((B, C, 1), jnp.float32)
    part_spec = pl.BlockSpec((pl.Squeezed(), C, 1), lambda b, i: (b, 0, 0))
    in_spec = pl.BlockSpec((pl.Squeezed(), C, tile), lambda b, i: (b, 0, i))

    tp_b, sl_b, sp_b = pl.pallas_call(
        kernel,
        out_shape=(part_shape, part_shape, part_shape),
        grid_spec=pltpu.PrefetchScalarGridSpec(
            num_scalar_prefetch=0,
            grid=(B, num_tiles),
            in_specs=[in_spec, in_spec],
            out_specs=(part_spec, part_spec, part_spec),
        ),
        compiler_params=pltpu.CompilerParams(
            dimension_semantics=("parallel", "arbitrary")),
    )(pred_r, label_r)

    # Tiny finalize over (B, C) partials in plain JAX: combine batches and
    # compute the Tversky score.  fn = sum(l) - tp, fp = sum(p) - tp.
    tp = jnp.sum(tp_b[:, :, 0], axis=0)          # (C,)
    sl = jnp.sum(sl_b[:, :, 0], axis=0)
    sp = jnp.sum(sp_b[:, :, 0], axis=0)
    fn = sl - tp
    fp = sp - tp
    tversky = (tp + eps) / (tp + alpha * fn + (1.0 - alpha) * fp + eps)
    return 1.0 - jnp.mean(tversky)


def _tversky_loss_ref(pred, label, alpha=0.7, eps=1.0):
    probs = jax.nn.sigmoid(pred.astype(jnp.float32))
    label = label.astype(jnp.float32)
    tp = jnp.sum(probs * label, axis=(0, 2, 3))
    fn = jnp.sum(label * (1.0 - probs), axis=(0, 2, 3))
    fp = jnp.sum(probs * (1.0 - label), axis=(0, 2, 3))
    return 1.0 - jnp.mean((tp + eps) / (tp + alpha * fn + (1.0 - alpha) * fp + eps))


if __name__ == "__main__":
    key = jax.random.PRNGKey(0)
    k1, k2 = jax.random.split(key)

    B, C, H, W = 2, 4, 16, 16
    pred = jax.random.normal(k1, (B, C, H, W), dtype=jnp.float32)
    label = (jax.random.uniform(k2, (B, C, H, W)) > 0.5).astype(jnp.float32)

    loss = tversky_loss(pred, label, alpha=0.7, eps=1.0)
    loss = jax.block_until_ready(loss)

    ref = _tversky_loss_ref(pred, label, alpha=0.7, eps=1.0)
    assert jnp.allclose(loss, ref, rtol=1e-5, atol=1e-5), (loss, ref)

    print("KERNEL_OK")
</pallas_src>

<mosaic_0001>
module attributes {stable_mosaic.version = 11 : i64} {
  func.func @_tversky_partial_kernel(%arg0: i32, %arg1: i32, %arg2: memref<1x4x256xf32, #tpu.memory_space<vmem>>, %arg3: memref<1x4x256xf32, #tpu.memory_space<vmem>>, %arg4: memref<1x4x1xf32, #tpu.memory_space<vmem>>, %arg5: memref<1x4x1xf32, #tpu.memory_space<vmem>>, %arg6: memref<1x4x1xf32, #tpu.memory_space<vmem>>) attributes {dimension_semantics = [#tpu.dimension_semantics<parallel>, #tpu.dimension_semantics<arbitrary>], iteration_bounds = array<i64: 2, 1>, scalar_prefetch = 0 : i64, scratch_operands = 0 : i64, tpu.core_type = #tpu.core_type<tc>, window_params = [{transform_indices = @transform_0, window_bounds = array<i64: 1, 4, 256>}, {transform_indices = @transform_1, window_bounds = array<i64: 1, 4, 256>}, {transform_indices = @transform_2, window_bounds = array<i64: 1, 4, 1>}, {transform_indices = @transform_3, window_bounds = array<i64: 1, 4, 1>}, {transform_indices = @transform_4, window_bounds = array<i64: 1, 4, 1>}]} {
    %c0_i32 = arith.constant 0 : i32
    %0 = arith.cmpi eq, %arg1, %c0_i32 : i32
    %1 = arith.extui %0 : i1 to i32
    %c0_i32_0 = arith.constant 0 : i32
    %2 = arith.cmpi ne, %1, %c0_i32_0 : i32
    scf.if %2 {
      %cst_27 = arith.constant 0.000000e+00 : f32
      %37 = vector.broadcast %cst_27 : f32 to vector<4x1xf32>
      %c0_28 = arith.constant 0 : index
      %c0_29 = arith.constant 0 : index
      %c0_30 = arith.constant 0 : index
      %38 = vector.load %arg4[%c0_28, %c0_29, %c0_30] : memref<1x4x1xf32, #tpu.memory_space<vmem>>, vector<1x4x1xf32>
      %39 = vector.shape_cast %38 : vector<1x4x1xf32> to vector<4x1xf32>
      %40 = vector.shape_cast %37 : vector<4x1xf32> to vector<1x4x1xf32>
      tpu.vector_store %arg4[%c0_28, %c0_29, %c0_30], %40 {strides = array<i32>} : memref<1x4x1xf32, #tpu.memory_space<vmem>>, vector<1x4x1xf32>,
      %cst_31 = arith.constant 0.000000e+00 : f32
      %41 = vector.broadcast %cst_31 : f32 to vector<4x1xf32>
      %c0_32 = arith.constant 0 : index
      %c0_33 = arith.constant 0 : index
      %c0_34 = arith.constant 0 : index
      %42 = vector.load %arg5[%c0_32, %c0_33, %c0_34] : memref<1x4x1xf32, #tpu.memory_space<vmem>>, vector<1x4x1xf32>
      %43 = vector.shape_cast %42 : vector<1x4x1xf32> to vector<4x1xf32>
      %44 = vector.shape_cast %41 : vector<4x1xf32> to vector<1x4x1xf32>
      tpu.vector_store %arg5[%c0_32, %c0_33, %c0_34], %44 {strides = array<i32>} : memref<1x4x1xf32, #tpu.memory_space<vmem>>, vector<1x4x1xf32>,
      %cst_35 = arith.constant 0.000000e+00 : f32
      %45 = vector.broadcast %cst_35 : f32 to vector<4x1xf32>
      %c0_36 = arith.constant 0 : index
      %c0_37 = arith.constant 0 : index
      %c0_38 = arith.constant 0 : index
      %46 = vector.load %arg6[%c0_36, %c0_37, %c0_38] : memref<1x4x1xf32, #tpu.memory_space<vmem>>, vector<1x4x1xf32>
      %47 = vector.shape_cast %46 : vector<1x4x1xf32> to vector<4x1xf32>
      %48 = vector.shape_cast %45 : vector<4x1xf32> to vector<1x4x1xf32>
      tpu.vector_store %arg6[%c0_36, %c0_37, %c0_38], %48 {strides = array<i32>} : memref<1x4x1xf32, #tpu.memory_space<vmem>>, vector<1x4x1xf32>,
    } else {
    }
    %c0 = arith.constant 0 : index
    %c0_1 = arith.constant 0 : index
    %c0_2 = arith.constant 0 : index
    %3 = vector.load %arg2[%c0, %c0_1, %c0_2] : memref<1x4x256xf32, #tpu.memory_space<vmem>>, vector<1x4x256xf32>
    %4 = vector.shape_cast %3 : vector<1x4x256xf32> to vector<4x256xf32>
    %5 = arith.negf %4 : vector<4x256xf32>
    %6 = math.exp %5 : vector<4x256xf32>
    %cst = arith.constant 1.000000e+00 : f32
    %7 = vector.broadcast %cst : f32 to vector<4x256xf32>
    %8 = arith.addf %7, %6 : vector<4x256xf32>
    %9 = arith.divf %7, %8 : vector<4x256xf32>
    %c0_3 = arith.constant 0 : index
    %c0_4 = arith.constant 0 : index
    %c0_5 = arith.constant 0 : index
    %10 = vector.load %arg3[%c0_3, %c0_4, %c0_5] : memref<1x4x256xf32, #tpu.memory_space<vmem>>, vector<1x4x256xf32>
    %11 = vector.shape_cast %10 : vector<1x4x256xf32> to vector<4x256xf32>
    %c0_6 = arith.constant 0 : index
    %c0_7 = arith.constant 0 : index
    %c0_8 = arith.constant 0 : index
    %12 = vector.load %arg4[%c0_6, %c0_7, %c0_8] : memref<1x4x1xf32, #tpu.memory_space<vmem>>, vector<1x4x1xf32>
    %13 = vector.shape_cast %12 : vector<1x4x1xf32> to vector<4x1xf32>
    %14 = arith.mulf %9, %11 : vector<4x256xf32>
    %cst_9 = arith.constant dense<0.000000e+00> : vector<4xf32>
    %15 = vector.multi_reduction <add>, %14, %cst_9 [1] : vector<4x256xf32> to vector<4xf32>
    %16 = vector.shape_cast %15 : vector<4xf32> to vector<4x1xf32>
    %17 = arith.addf %13, %16 : vector<4x1xf32>
    %c0_10 = arith.constant 0 : index
    %c0_11 = arith.constant 0 : index
    %c0_12 = arith.constant 0 : index
    %18 = vector.load %arg4[%c0_10, %c0_11, %c0_12] : memref<1x4x1xf32, #tpu.memory_space<vmem>>, vector<1x4x1xf32>
    %19 = vector.shape_cast %18 : vector<1x4x1xf32> to vector<4x1xf32>
    %20 = vector.shape_cast %17 : vector<4x1xf32> to vector<1x4x1xf32>
    tpu.vector_store %arg4[%c0_10, %c0_11, %c0_12], %20 {strides = array<i32>} : memref<1x4x1xf32, #tpu.memory_space<vmem>>, vector<1x4x1xf32>,
    %c0_13 = arith.constant 0 : index
    %c0_14 = arith.constant 0 : index
    %c0_15 = arith.constant 0 : index
    %21 = vector.load %arg5[%c0_13, %c0_14, %c0_15] : memref<1x4x1xf32, #tpu.memory_space<vmem>>, vector<1x4x1xf32>
    %22 = vector.shape_cast %21 : vector<1x4x1xf32> to vector<4x1xf32>
    %cst_16 = arith.constant dense<0.000000e+00> : vector<4xf32>
    %23 = vector.multi_reduction <add>, %11, %cst_16 [1] : vector<4x256xf32> to vector<4xf32>
    %24 = vector.shape_cast %23 : vector<4xf32> to vector<4x1xf32>
    %25 = arith.addf %22, %24 : vector<4x1xf32>
    %c0_17 = arith.constant 0 : index
    %c0_18 = arith.constant 0 : index
    %c0_19 = arith.constant 0 : index
    %26 = vector.load %arg5[%c0_17, %c0_18, %c0_19] : memref<1x4x1xf32, #tpu.memory_space<vmem>>, vector<1x4x1xf32>
    %27 = vector.shape_cast %26 : vector<1x4x1xf32> to vector<4x1xf32>
    %28 = vector.shape_cast %25 : vector<4x1xf32> to vector<1x4x1xf32>
    tpu.vector_store %arg5[%c0_17, %c0_18, %c0_19], %28 {strides = array<i32>} : memref<1x4x1xf32, #tpu.memory_space<vmem>>, vector<1x4x1xf32>,
    %c0_20 = arith.constant 0 : index
    %c0_21 = arith.constant 0 : index
    %c0_22 = arith.constant 0 : index
    %29 = vector.load %arg6[%c0_20, %c0_21, %c0_22] : memref<1x4x1xf32, #tpu.memory_space<vmem>>, vector<1x4x1xf32>
    %30 = vector.shape_cast %29 : vector<1x4x1xf32> to vector<4x1xf32>
    %cst_23 = arith.constant dense<0.000000e+00> : vector<4xf32>
    %31 = vector.multi_reduction <add>, %9, %cst_23 [1] : vector<4x256xf32> to vector<4xf32>
    %32 = vector.shape_cast %31 : vector<4xf32> to vector<4x1xf32>
    %33 = arith.addf %30, %32 : vector<4x1xf32>
    %c0_24 = arith.constant 0 : index
    %c0_25 = arith.constant 0 : index
    %c0_26 = arith.constant 0 : index
    %34 = vector.load %arg6[%c0_24, %c0_25, %c0_26] : memref<1x4x1xf32, #tpu.memory_space<vmem>>, vector<1x4x1xf32>
    %35 = vector.shape_cast %34 : vector<1x4x1xf32> to vector<4x1xf32>
    %36 = vector.shape_cast %33 : vector<4x1xf32> to vector<1x4x1xf32>
    tpu.vector_store %arg6[%c0_24, %c0_25, %c0_26], %36 {strides = array<i32>} : memref<1x4x1xf32, #tpu.memory_space<vmem>>, vector<1x4x1xf32>,
    return
  }
  func.func @transform_0(%arg0: i32, %arg1: i32) -> (i32, i32, i32) {
    %c0_i32 = arith.constant 0 : i32
    %c0_i32_0 = arith.constant 0 : i32
    return %arg0, %c0_i32, %arg1 : i32, i32, i32
  }
  func.func @transform_1(%arg0: i32, %arg1: i32) -> (i32, i32, i32) {
    %c0_i32 = arith.constant 0 : i32
    %c0_i32_0 = arith.constant 0 : i32
    return %arg0, %c0_i32, %arg1 : i32, i32, i32
  }
  func.func @transform_2(%arg0: i32, %arg1: i32) -> (i32, i32, i32) {
    %c0_i32 = arith.constant 0 : i32
    %c0_i32_0 = arith.constant 0 : i32
    %c0_i32_1 = arith.constant 0 : i32
    return %arg0, %c0_i32, %c0_i32_0 : i32, i32, i32
  }
  func.func @transform_3(%arg0: i32, %arg1: i32) -> (i32, i32, i32) {
    %c0_i32 = arith.constant 0 : i32
    %c0_i32_0 = arith.constant 0 : i32
    %c0_i32_1 = arith.constant 0 : i32
    return %arg0, %c0_i32, %c0_i32_0 : i32, i32, i32
  }
  func.func @transform_4(%arg0: i32, %arg1: i32) -> (i32, i32, i32) {
    %c0_i32 = arith.constant 0 : i32
    %c0_i32_0 = arith.constant 0 : i32
    %c0_i32_1 = arith.constant 0 : i32
    return %arg0, %c0_i32, %c0_i32_0 : i32, i32, i32
  }
}

</mosaic_0001>

<llo_original>
// kernel: tpu_custom_call.1
$region0: #{tpu_custom_call.1}
  #allocation0 [shape = 'u32[]', space=smem, size = 0x4, offset = 0x4, fixed_abs, tag = 'smem constant byte address 0x4 - core index']
  #allocation1 [shape = 'u32[144,128]{1,0:T(1,128)}', space=vmem, size = 0x12000, scoped, tag = 'internal scratch']
  %s0 = inlined_call_operand.hbm [shape: f32[2,4,256], index: 0, kind: input, shape index: {}]
  %s1 = inlined_call_operand.hbm [shape: f32[2,4,256], index: 1, kind: input, shape index: {}]
  %s2 = inlined_call_operand.vmem [shape: f32[2,4,1], index: 2, kind: output, shape index: {0}]
  %s3 = inlined_call_operand.vmem [shape: f32[2,4,1], index: 3, kind: output, shape index: {1}]
  %s4 = inlined_call_operand.vmem [shape: f32[2,4,1], index: 4, kind: output, shape index: {2}]
  %5 = xla_tuple %s2, %s3, %s4
  %s6 = sld [smem:[#allocation0]]
  $region69: #{tpu_custom_call.1} parent=0
    _
  %s8 = ssub.s32 1, %s6
  %s9 = scalar_select 0, %s8, %s6
  $region1: #{tpu_custom_call.1} parent=0
    #allocation2 [shape = 'u8[8192]{0}', space=vmem, size = 0x2000, scoped, tag = 'input window, operand 0']
    #allocation3 [shape = 's32[2]{0}', space=sflag, size = 0x8, scoped, tag = 'scoped memory for tpu_custom_call.1']
    #allocation4 [shape = 'u8[8192]{0}', space=vmem, size = 0x2000, scoped, tag = 'input window, operand 1']
    #allocation5 [shape = 's32[2]{0}', space=sflag, size = 0x8, scoped, tag = 'scoped memory for tpu_custom_call.1']
    %10 = vsyncpa [#allocation3], 0
    %s11 = scalar_lea.sflag [#allocation3], 1
    %12 = vsyncpa %s11, 0
    %13 = vsyncpa [#allocation5], 0
    %s14 = scalar_lea.sflag [#allocation5], 1
    %15 = vsyncpa %s14, 0
    loop: start=0, step=1, limit=4
    $region2: #{tpu_custom_call.1} parent=1 // loop_pre_header
      _
    $region3: #{tpu_custom_call.1} parent=1 // loop_header
      %s17 = sphi 0, %s21
      %p18 = scmp.ge.s32.totalorder %s17, 4
      %s24 = sphi 0, %s36
      %s25 = sphi 0, %s32
      %s26 = sphi 0, %s24
      %s27 = sphi 0, %s25
      %s28 = sphi 0, %s26
      %s29 = sphi 0, %s27
      %s41 = sphi 0, %s43
      %s44 = sphi 0, %s41
      %s45 = sphi 0, %s44
      %s61 = sphi 0, %s45
      %s69 = sphi 0, %s71
      %s72 = sphi 0, %s69
      %s73 = sphi 0, %s72
      %s89 = sphi 0, %s73
      %s95 = sphi 0, %s97
      %s98 = sphi 0, %s95
      %s99 = sphi 0, %s98
      %s115 = sphi 0, %s99
      %s121 = sphi 0, %s123
      %s124 = sphi 0, %s121
      %s125 = sphi 0, %s124
      %s141 = sphi 0, %s125
      %s147 = sphi 0, %s149
      %s150 = sphi 0, %s147
      %s151 = sphi 0, %s150
      %s167 = sphi 0, %s151
    $region4: #{tpu_custom_call.1} parent=1 // loop_header_branch
      %20 = sbr.rel (%p18) target = $region8
    $region5: #{tpu_custom_call.1} parent=1 // loop_body
      %s22 = ssub.s32 %s17, 1
      %s23 = ssub.s32 %s17, 2
      %s30 = sadd.s32 1, %s25
      %p31 = scmp.ge.s32.totalorder %s30, 1
      %s32 = scalar_select %p31, 0, %s30
      %s33 = sadd.s32 1, %s24
      %s34 = scalar_select %p31, %s33, %s24
      %p35 = scmp.ge.s32.totalorder %s34, 2
      %s36 = scalar_select %p35, 0, %s34
      %s37 = ssub.s32 %s24, %s36
      %s38 = ssub.s32 %s25, %s32
      %s39 = sor.u32 %s37, %s38
      %p40 = scmp.eq.s32.totalorder %s39, 0
      %s42 = sadd.s32 %s41, 1
      %s43 = scalar_select %p40, %s41, %s42
      %p46 = pneg %p40
      %p47 = scmp.eq.s32.totalorder %s17, 1
      %p48 = por %p46, %p47
      %p49 = scmp.ne.s32.totalorder %s41, %s44
      %p50 = scmp.eq.s32.totalorder %s17, 0
      %p51 = por %p49, %p50
      %p52 = scmp.ne.s32.totalorder %s41, %s44
      %p53 = scmp.eq.s32.totalorder %s22, 1
      %p54 = por %p52, %p53
      %p55 = scmp.ne.s32.totalorder %s44, %s45
      %p56 = scmp.eq.s32.totalorder %s22, 0
      %p57 = por %p55, %p56
      %p58 = scmp.ne.s32.totalorder %s44, %s45
      %p59 = scmp.eq.s32.totalorder %s23, 1
      %p60 = por %p58, %p59
      %p62 = scmp.ne.s32.totalorder %s45, %s61
      %p63 = scmp.eq.s32.totalorder %s23, 0
      %p64 = por %p62, %p63
      %s65 = ssub.s32 %s24, %s36
      %s66 = ssub.s32 %s25, %s32
      %s67 = sor.u32 %s65, %s66
      %p68 = scmp.eq.s32.totalorder %s67, 0
      %s70 = sadd.s32 %s69, 1
      %s71 = scalar_select %p68, %s69, %s70
      %p74 = pneg %p68
      %p75 = scmp.eq.s32.totalorder %s17, 1
      %p76 = por %p74, %p75
      %p77 = scmp.ne.s32.totalorder %s69, %s72
      %p78 = scmp.eq.s32.totalorder %s17, 0
      %p79 = por %p77, %p78
      %p80 = scmp.ne.s32.totalorder %s69, %s72
      %p81 = scmp.eq.s32.totalorder %s22, 1
      %p82 = por %p80, %p81
      %p83 = scmp.ne.s32.totalorder %s72, %s73
      %p84 = scmp.eq.s32.totalorder %s22, 0
      %p85 = por %p83, %p84
      %p86 = scmp.ne.s32.totalorder %s72, %s73
      %p87 = scmp.eq.s32.totalorder %s23, 1
      %p88 = por %p86, %p87
      %p90 = scmp.ne.s32.totalorder %s73, %s89
      %p91 = scmp.eq.s32.totalorder %s23, 0
      %p92 = por %p90, %p91
      %s93 = ssub.s32 %s24, %s36
      %p94 = scmp.eq.s32.totalorder %s93, 0
      %s96 = sadd.s32 %s95, 1
      %s97 = scalar_select %p94, %s95, %s96
      %p100 = pneg %p94
      %p101 = scmp.eq.s32.totalorder %s17, 1
      %p102 = por %p100, %p101
      %p103 = scmp.ne.s32.totalorder %s95, %s98
      %p104 = scmp.eq.s32.totalorder %s17, 0
      %p105 = por %p103, %p104
      %p106 = scmp.ne.s32.totalorder %s95, %s98
      %p107 = scmp.eq.s32.totalorder %s22, 1
      %p108 = por %p106, %p107
      %p109 = scmp.ne.s32.totalorder %s98, %s99
      %p110 = scmp.eq.s32.totalorder %s22, 0
      %p111 = por %p109, %p110
      %p112 = scmp.ne.s32.totalorder %s98, %s99
      %p113 = scmp.eq.s32.totalorder %s23, 1
      %p114 = por %p112, %p113
      %p116 = scmp.ne.s32.totalorder %s99, %s115
      %p117 = scmp.eq.s32.totalorder %s23, 0
      %p118 = por %p116, %p117
      %s119 = ssub.s32 %s24, %s36
      %p120 = scmp.eq.s32.totalorder %s119, 0
      %s122 = sadd.s32 %s121, 1
      %s123 = scalar_select %p120, %s121, %s122
      %p126 = pneg %p120
      %p127 = scmp.eq.s32.totalorder %s17, 1
      %p128 = por %p126, %p127
      %p129 = scmp.ne.s32.totalorder %s121, %s124
      %p130 = scmp.eq.s32.totalorder %s17, 0
      %p131 = por %p129, %p130
      %p132 = scmp.ne.s32.totalorder %s121, %s124
      %p133 = scmp.eq.s32.totalorder %s22, 1
      %p134 = por %p132, %p133
      %p135 = scmp.ne.s32.totalorder %s124, %s125
      %p136 = scmp.eq.s32.totalorder %s22, 0
      %p137 = por %p135, %p136
      %p138 = scmp.ne.s32.totalorder %s124, %s125
      %p139 = scmp.eq.s32.totalorder %s23, 1
      %p140 = por %p138, %p139
      %p142 = scmp.ne.s32.totalorder %s125, %s141
      %p143 = scmp.eq.s32.totalorder %s23, 0
      %p144 = por %p142, %p143
      %s145 = ssub.s32 %s24, %s36
      %p146 = scmp.eq.s32.totalorder %s145, 0
      %s148 = sadd.s32 %s147, 1
      %s149 = scalar_select %p146, %s147, %s148
      %p152 = pneg %p146
      %p153 = scmp.eq.s32.totalorder %s17, 1
      %p154 = por %p152, %p153
      %p155 = scmp.ne.s32.totalorder %s147, %s150
      %p156 = scmp.eq.s32.totalorder %s17, 0
      %p157 = por %p155, %p156
      %p158 = scmp.ne.s32.totalorder %s147, %s150
      %p159 = scmp.eq.s32.totalorder %s22, 1
      %p160 = por %p158, %p159
      %p161 = scmp.ne.s32.totalorder %s150, %s151
      %p162 = scmp.eq.s32.totalorder %s22, 0
      %p163 = por %p161, %p162
      %p164 = scmp.ne.s32.totalorder %s150, %s151
      %p165 = scmp.eq.s32.totalorder %s23, 1
      %p166 = por %p164, %p165
      %p168 = scmp.ne.s32.totalorder %s151, %s167
      %p169 = scmp.eq.s32.totalorder %s23, 0
      %p170 = por %p168, %p169
      %p171 = scmp.le.s32.totalorder 1, %s17
      %p172 = scmp.lt.s32.totalorder %s17, 3
      %p173 = pnand %p171, %p172
      %p174 = pneg %p173
      // Predicated region
      $region9: #{tpu_custom_call.1} parent=5 // pred_check
        _
      $region10: #{tpu_custom_call.1} parent=5 // pred_check_branch
        %176 = sbr.rel (%p173) target = $region12
      $region11: #{tpu_custom_call.1} parent=5 // pred_region
        %s177 = ssub.s32 %s17, 1
      $region12: #{tpu_custom_call.1} parent=5 // pred_fallthru
        _
      %p178 = scmp.lt.s32.totalorder %s17, 2
      // Predicated region
      $region13: #{tpu_custom_call.1} parent=5 // pred_check
        %p179 = pneg %p178
      $region14: #{tpu_custom_call.1} parent=5 // pred_check_branch
        %181 = sbr.rel (%p179) target = $region16
      $region15: #{tpu_custom_call.1} parent=5 // pred_region
        // Predicated region
        $region17: #{tpu_custom_call.1} parent=15 // pred_check
          %p182 = pneg %p51
        $region18: #{tpu_custom_call.1} parent=15 // pred_check_branch
          %184 = sbr.rel (%p182) target = $region20
        $region19: #{tpu_custom_call.1} parent=15 // pred_region
          %s185 = sand.u32 %s41, 1
          %s186 = scalar_lea.sflag [#allocation3], %s185
          %s187 = sand.u32 %s41, 1
          %s188 = smul.addr %s187, 8
          %s189 = scalar_lea.vmem [#allocation2], %s188
          %s190 = smul.u32 2, %s25
          %s192 = ssub.s32 128, 128
          %193 = vsyncadd %s186, %s192
          %s194 = smul.addr %s24, 2
          %s195 = sadd.s32 %s190, %s194
          %s196 = smul.addr %s195, 64
          %s197 = scalar_lea.hbm %s0, %s196
          %s199 = sshll.u32 %s189, 4
          %s200 = int_to_ptr.vmem [resolvable:$true] %s199
          %202 = dma.hbm_to_vmem [thread:$0]  %s197, 128, %s200, %s186
        $region20: #{tpu_custom_call.1} parent=15 // pred_fallthru
          _
        // Predicated region
        $region21: #{tpu_custom_call.1} parent=15 // pred_check
          %p203 = pneg %p79
        $region22: #{tpu_custom_call.1} parent=15 // pred_check_branch
          %205 = sbr.rel (%p203) target = $region24
        $region23: #{tpu_custom_call.1} parent=15 // pred_region
          %s206 = sand.u32 %s69, 1
          %s207 = scalar_lea.sflag [#allocation5], %s206
          %s208 = sand.u32 %s69, 1
          %s209 = smul.addr %s208, 8
          %s210 = scalar_lea.vmem [#allocation4], %s209
          %s211 = smul.u32 2, %s25
          %s213 = ssub.s32 128, 128
          %214 = vsyncadd %s207, %s213
          %s215 = smul.addr %s24, 2
          %s216 = sadd.s32 %s211, %s215
          %s217 = smul.addr %s216, 64
          %s218 = scalar_lea.hbm %s1, %s217
          %s220 = sshll.u32 %s210, 4
          %s221 = int_to_ptr.vmem [resolvable:$true] %s220
          %223 = dma.hbm_to_vmem [thread:$0]  %s218, 128, %s221, %s207
        $region24: #{tpu_custom_call.1} parent=15 // pred_fallthru
          _
      $region16: #{tpu_custom_call.1} parent=5 // pred_fallthru
        _
      %p224 = scmp.le.s32.totalorder 1, %s17
      %p225 = scmp.lt.s32.totalorder %s17, 3
      %p226 = pnand %p224, %p225
      %p227 = pneg %p226
      // Predicated region
      $region25: #{tpu_custom_call.1} parent=5 // pred_check
        _
      $region26: #{tpu_custom_call.1} parent=5 // pred_check_branch
        %229 = sbr.rel (%p226) target = $region28
      $region27: #{tpu_custom_call.1} parent=5 // pred_region
        %s230 = ssub.s32 %s17, 1
        %s231 = sand.u32 %s44, 1
        %s232 = scalar_lea.sflag [#allocation3], %s231
        %s233 = sand.u32 %s44, 1
        %s234 = smul.addr %s233, 8
        %s235 = scalar_lea.vmem [#allocation2], %s234
        // Predicated region
        $region29: #{tpu_custom_call.1} parent=27 // pred_check
          %p236 = pneg %p57
        $region30: #{tpu_custom_call.1} parent=27 // pred_check_branch
          %238 = sbr.rel (%p236) target = $region32
        $region31: #{tpu_custom_call.1} parent=27 // pred_region
          %239 = dma.done %s232, 128
        $region32: #{tpu_custom_call.1} parent=27 // pred_fallthru
          _
        %s240 = sand.u32 %s72, 1
        %s241 = scalar_lea.sflag [#allocation5], %s240
        %s242 = sand.u32 %s72, 1
        %s243 = smul.addr %s242, 8
        %s244 = scalar_lea.vmem [#allocation4], %s243
        // Predicated region
        $region33: #{tpu_custom_call.1} parent=27 // pred_check
          %p245 = pneg %p85
        $region34: #{tpu_custom_call.1} parent=27 // pred_check_branch
          %247 = sbr.rel (%p245) target = $region36
        $region35: #{tpu_custom_call.1} parent=27 // pred_region
          %248 = dma.done %s241, 128
        $region36: #{tpu_custom_call.1} parent=27 // pred_fallthru
          _
        %s249 = sand.u32 %s44, 1
        %s250 = scalar_lea.sflag [#allocation3], %s249
        %s251 = sand.u32 %s44, 1
        %s252 = smul.addr %s251, 8
        %s253 = scalar_lea.vmem [#allocation2], %s252
        %p254 = pneg %p57
        %p255 = pneg %p54
        %s256 = sand.u32 %s72, 1
        %s257 = scalar_lea.sflag [#allocation5], %s256
        %s258 = sand.u32 %s72, 1
        %s259 = smul.addr %s258, 8
        %s260 = scalar_lea.vmem [#allocation4], %s259
        %p261 = pneg %p85
        %p262 = pneg %p82
        %p263 = pneg %p111
        %p264 = pneg %p108
        %p265 = scmp.lt.s32.totalorder %s26, 1
        %s266 = scalar_select %p265, %s26, 1
        %s267 = smul.addr %s266, 4
        %s268 = scalar_lea.vmem %s2, %s267
        %p269 = pneg %p137
        %p270 = pneg %p134
        %p271 = scmp.lt.s32.totalorder %s26, 1
        %s272 = scalar_select %p271, %s26, 1
        %s273 = smul.addr %s272, 4
        %s274 = scalar_lea.vmem %s3, %s273
        %p275 = pneg %p163
        %p276 = pneg %p160
        %p277 = scmp.lt.s32.totalorder %s26, 1
        %s278 = scalar_select %p277, %s26, 1
        %s279 = smul.addr %s278, 4
        %s280 = scalar_lea.vmem %s4, %s279
        %s281 = smul.u32 2, %s27
        %s282 = smul.u32 2, %s27
        %p283 = scmp.lt.s32.totalorder %s26, 1
        %s284 = scalar_select %p283, %s26, 1
        %s285 = smul.addr %s284, 4
        %s286 = scalar_lea.vmem %s2, %s285
        %p287 = scmp.lt.s32.totalorder %s26, 1
        %s288 = scalar_select %p287, %s26, 1
        %s289 = smul.addr %s288, 4
        %s290 = scalar_lea.vmem %s3, %s289
        %p291 = scmp.lt.s32.totalorder %s26, 1
        %s292 = scalar_select %p291, %s26, 1
        %s293 = smul.addr %s292, 4
        %s294 = scalar_lea.vmem %s4, %s293
        %p295 = scmp.eq.s32.totalorder %s27, 0
        // Predicated region
        $region37: #{tpu_custom_call.1} parent=27 // pred_check
          %p296 = pneg %p295
        $region38: #{tpu_custom_call.1} parent=27 // pred_check_branch
          %298 = sbr.rel (%p296) target = $region40
        $region39: #{tpu_custom_call.1} parent=27 // pred_region
          %vm299 = vcmask 3072
          %300 = vst.msk [vmem:[%s286] sm:$0xf] %vm299, 0.0
          %301 = vst.msk [vmem:[%s290] sm:$0xf] %vm299, 0.0
          %302 = vst.msk [vmem:[%s294] sm:$0xf] %vm299, 0.0
        $region40: #{tpu_custom_call.1} parent=27 // pred_fallthru
          _
        %v303 = vld [vmem:[%s235] sm:$0xff]
        %v304 = vxor.u32 %v303, 2147483648
        %v305 = vmul.f32 %v304, 1.442695
        %v306 = vpow.pop %v305
        %v307 = vadd.f32 %v306, 1.0
        %v308 = vrcp.pop %v307
        %v309 = vmul.f32 1.0, %v308
        %v310 = vld [vmem:[%s244] sm:$0xff]
        %v311 = vld [vmem:[%s286] sm:$0xf]
        %v312 = vmul.f32 %v309, %v310
        %v314 = vcombine.high %v312, %v312
        %vm316 = vcmask 1043456
        %v317 = vsel %vm316, %v312, 0.0
        %v318 = vsel %vm316, %v314, 0.0
        %v319 = vadd.f32 %v317, %v318
        %320 = vadd.xlane.f32.xlu0 %v319
        %v321 = vpop.xlane.xlu0 %320
        %v322 = vadd.f32 %v311, %v321
        %vm323 = vcmask 3072
        %324 = vst.msk [vmem:[%s286] sm:$0xf] %vm323, %v322
        %v325 = vld [vmem:[%s290] sm:$0xf]
        %v327 = vcombine.high %v310, %v310
        %v329 = vsel %vm316, %v310, 0.0
        %v330 = vsel %vm316, %v327, 0.0
        %v331 = vadd.f32 %v329, %v330
        %332 = vadd.xlane.f32.xlu0 %v331
        %v333 = vpop.xlane.xlu0 %332
        %v334 = vadd.f32 %v325, %v333
        %335 = vst.msk [vmem:[%s290] sm:$0xf] %vm323, %v334
        %v336 = vld [vmem:[%s294] sm:$0xf]
        %v338 = vcombine.high %v309, %v309
        %v340 = vsel %vm316, %v309, 0.0
        %v341 = vsel %vm316, %v338, 0.0
        %v342 = vadd.f32 %v340, %v341
        %343 = vadd.xlane.f32.xlu0 %v342
        %v344 = vpop.xlane.xlu0 %343
        %v345 = vadd.f32 %v336, %v344
        %346 = vst.msk [vmem:[%s294] sm:$0xf] %vm323, %v345
        %p347 = scmp.lt.s32.totalorder %s26, 1
        %s348 = scalar_select %p347, %s26, 1
        %s349 = smul.addr %s348, 4
        %s350 = scalar_lea.vmem %s2, %s349
        %p351 = scmp.lt.s32.totalorder %s26, 1
        %s352 = scalar_select %p351, %s26, 1
        %s353 = smul.addr %s352, 4
        %s354 = scalar_lea.vmem %s3, %s353
        %p355 = scmp.lt.s32.totalorder %s26, 1
        %s356 = scalar_select %p355, %s26, 1
        %s357 = smul.addr %s356, 4
        %s358 = scalar_lea.vmem %s4, %s357
        // Predicated region
        $region41: #{tpu_custom_call.1} parent=27 // pred_check
          %p359 = pneg %p108
        $region42: #{tpu_custom_call.1} parent=27 // pred_check_branch
          %361 = sbr.rel (%p359) target = $region44
        $region43: #{tpu_custom_call.1} parent=27 // pred_region
          _
        $region44: #{tpu_custom_call.1} parent=27 // pred_fallthru
          _
        // Predicated region
        $region45: #{tpu_custom_call.1} parent=27 // pred_check
          %p362 = pneg %p134
        $region46: #{tpu_custom_call.1} parent=27 // pred_check_branch
          %364 = sbr.rel (%p362) target = $region48
        $region47: #{tpu_custom_call.1} parent=27 // pred_region
          _
        $region48: #{tpu_custom_call.1} parent=27 // pred_fallthru
          _
        // Predicated region
        $region49: #{tpu_custom_call.1} parent=27 // pred_check
          %p365 = pneg %p160
        $region50: #{tpu_custom_call.1} parent=27 // pred_check_branch
          %367 = sbr.rel (%p365) target = $region52
        $region51: #{tpu_custom_call.1} parent=27 // pred_region
          _
        $region52: #{tpu_custom_call.1} parent=27 // pred_fallthru
          _
      $region28: #{tpu_custom_call.1} parent=5 // pred_fallthru
        _
      %p368 = scmp.le.s32.totalorder 2, %s17
      // Predicated region
      $region53: #{tpu_custom_call.1} parent=5 // pred_check
        %p369 = pneg %p368
      $region54: #{tpu_custom_call.1} parent=5 // pred_check_branch
        %371 = sbr.rel (%p369) target = $region56
      $region55: #{tpu_custom_call.1} parent=5 // pred_region
        %s372 = ssub.s32 %s17, 2
        // Predicated region
        $region57: #{tpu_custom_call.1} parent=55 // pred_check
          %p373 = pneg %p114
        $region58: #{tpu_custom_call.1} parent=55 // pred_check_branch
          %375 = sbr.rel (%p373) target = $region60
        $region59: #{tpu_custom_call.1} parent=55 // pred_region
          %p376 = scmp.lt.s32.totalorder %s28, 1
          %s377 = scalar_select %p376, %s28, 1
          %s378 = smul.addr %s377, 4
          %s379 = scalar_lea.vmem %s2, %s378
        $region60: #{tpu_custom_call.1} parent=55 // pred_fallthru
          _
        // Predicated region
        $region61: #{tpu_custom_call.1} parent=55 // pred_check
          %p380 = pneg %p140
        $region62: #{tpu_custom_call.1} parent=55 // pred_check_branch
          %382 = sbr.rel (%p380) target = $region64
        $region63: #{tpu_custom_call.1} parent=55 // pred_region
          %p383 = scmp.lt.s32.totalorder %s28, 1
          %s384 = scalar_select %p383, %s28, 1
          %s385 = smul.addr %s384, 4
          %s386 = scalar_lea.vmem %s3, %s385
        $region64: #{tpu_custom_call.1} parent=55 // pred_fallthru
          _
        // Predicated region
        $region65: #{tpu_custom_call.1} parent=55 // pred_check
          %p387 = pneg %p166
        $region66: #{tpu_custom_call.1} parent=55 // pred_check_branch
          %389 = sbr.rel (%p387) target = $region68
        $region67: #{tpu_custom_call.1} parent=55 // pred_region
          %p390 = scmp.lt.s32.totalorder %s28, 1
          %s391 = scalar_select %p390, %s28, 1
          %s392 = smul.addr %s391, 4
          %s393 = scalar_lea.vmem %s4, %s392
        $region68: #{tpu_custom_call.1} parent=55 // pred_fallthru
          _
      $region56: #{tpu_custom_call.1} parent=5 // pred_fallthru
        _
    $region6: #{tpu_custom_call.1} parent=1 // loop_footer
      %s21 = sadd.s32 1, %s17
    $region7: #{tpu_custom_call.1} parent=1 // loop_footer_branch
      %16 = sbr.rel target = $region3
    $region8: #{tpu_custom_call.1} parent=1 // loop_exit
      _
    %394 = vsyncpa [#allocation3], 1
    %s395 = scalar_lea.sflag [#allocation3], 1
    %396 = vsyncpa %s395, 1
    %397 = vsyncpa [#allocation5], 1
    %s398 = scalar_lea.sflag [#allocation5], 1
    %399 = vsyncpa %s398, 1

</llo_original>
